<compile_context>
chip_gen: v5e
topology: v5e:2x2
jax: 0.10.0
libtpu: 0.0.40
codegen_flags: <defaults>
</compile_context>

<pallas_src>
import jax
import jax.numpy as jnp
from jax.experimental import pallas as pl
from jax.experimental.pallas import tpu as pltpu

_MIN_PALLAS_BYTES = 512 * 1024   # below this XLA's fused slice/add is already near roofline
_MIN_GRID_STEPS = 4              # >= 2x TC count (v7x) and enough steps for double-buffering
_VMEM_HEADROOM = 2 << 20         # slack for Mosaic internal scratch


# ----------------------------- kernels --------------------------------------

def _make_sum_kernel(chunks: int, acc_dtype):
    """Read one (tr, L) slab, tree-sum its `chunks` lane-aligned slices."""
    def kernel(x_ref, o_ref):
        cs = o_ref.shape[-1]
        # Pairwise/tree reduction: bounds vreg live ranges and exposes ILP to
        # the 4 VALU slots (matters for large `chunks` with big slabs).
        parts = [x_ref[:, k * cs:(k + 1) * cs].astype(acc_dtype)
                 for k in range(chunks)]
        while len(parts) > 1:
            nxt = [parts[i] + parts[i + 1] for i in range(0, len(parts) - 1, 2)]
            if len(parts) % 2:
                nxt.append(parts[-1])
            parts = nxt
        o_ref[...] = parts[0].astype(o_ref.dtype)
    return kernel


def _make_split_kernel(chunks: int):
    """Read one (tr, L) slab, write each chunk to its own output (one pass)."""
    def kernel(x_ref, *o_refs):
        cs = o_refs[0].shape[-1]
        for k in range(chunks):          # wide, unmasked lane-dense stores
            o_refs[k][...] = x_ref[:, k * cs:(k + 1) * cs]
    return kernel


# ----------------------------- helpers ---------------------------------------

def _chunk_ref(x, chunks: int, dim: int):
    """torch.chunk semantics in jnp (handles ragged final / missing chunks)."""
    L = x.shape[dim]
    cs = -(-L // chunks)                 # ceil
    splits = list(range(cs, L, cs))
    return tuple(jnp.split(x, splits, axis=dim))


def _round_up(n: int, m: int) -> int:
    return -(-n // m) * m


def _tpu_budget():
    """Per-generation scoped-VMEM limit and slab targets (bytes)."""
    vmem_phys = 64 << 20                 # conservative default == v7x per-TC
    try:
        info = pltpu.get_tpu_info()
        vmem_phys = int(getattr(info, "vmem_capacity_bytes", vmem_phys))
    except Exception:
        pass
    if vmem_phys >= (96 << 20):          # v5e / v6e: 128 MiB physical VMEM
        return {"vmem_limit": 64 << 20, "sum_slab": 12 << 20, "split_slab": 8 << 20}
    # v7x: 64 MiB physical VMEM -> split path must stay conservative (4x slab),
    # sum path (2x slab) can use bigger slabs to amortize per-step overhead.
    return {"vmem_limit": 32 << 20, "sum_slab": 10 << 20, "split_slab": 6 << 20}


def _pick_row_tile(R: int, row_bytes: int, slab_bytes: int,
                   min_steps: int = _MIN_GRID_STEPS) -> int:
    """Multiple-of-8 row tile: big slabs, but always a multi-step (even) grid."""
    R8 = _round_up(R, 8)
    tr = max(8, min(R8, (slab_bytes // max(1, row_bytes)) // 8 * 8))
    # Guarantee a multi-step grid so double-buffering / megacore engage.
    if pl.cdiv(R, tr) < min_steps:
        tr = max(8, (R8 // min_steps) // 8 * 8)
    # Prefer an even step count so v7x's two TensorCores stay balanced.
    steps = pl.cdiv(R, tr)
    if steps > 1 and steps % 2 == 1:
        tr_even = _round_up(pl.cdiv(R, steps + 1), 8)
        if tr_even >= 8 and pl.cdiv(R, tr_even) % 2 == 0:
            tr = tr_even
    return tr


def _fits_vmem(tr, L, cs, chunks, itemsize, sum_outputs, vmem_limit) -> bool:
    """Double-buffered VMEM footprint guard (prevents compile-time VMEM OOM)."""
    if sum_outputs:
        fp = 2 * tr * L * itemsize + 2 * tr * cs * itemsize + tr * cs * 4  # + acc
    else:
        fp = 2 * tr * L * itemsize + 2 * chunks * tr * cs * itemsize
    return fp + _VMEM_HEADROOM <= vmem_limit


# ----------------------------- wrapper ---------------------------------------

def chunk_forward(x, chunks: int, dim: int = -1, sum_outputs: bool = False,
                  *, force_pallas_split: bool = False,
                  min_pallas_bytes: int = _MIN_PALLAS_BYTES):
    ndim = x.ndim
    dim = dim % ndim
    L = x.shape[dim]

    dtype_ok = any(x.dtype == d for d in
                   (jnp.float32, jnp.bfloat16, jnp.float16, jnp.int32))

    use_pallas = (
        dim == ndim - 1
        and L % chunks == 0
        and (L // chunks) % 128 == 0
        and dtype_ok
        and x.size * x.dtype.itemsize >= min_pallas_bytes
        # For plain splitting, XLA fuses last-axis slices into consumers and
        # avoids materializing 2N bytes of HBM traffic; Pallas split is opt-in.
        and (sum_outputs or force_pallas_split)
    )

    lead = x.shape[:-1]
    R = 1
    for d in lead:
        R *= d
    if use_pallas and R < 8:
        use_pallas = False

    tr = None
    budget = None
    if use_pallas:
        budget = _tpu_budget()
        itemsize = x.dtype.itemsize
        cs = L // chunks
        slab = budget["sum_slab"] if sum_outputs else budget["split_slab"]
        tr = _pick_row_tile(R, L * itemsize, slab)
        while tr > 8 and not _fits_vmem(tr, L, cs, chunks, itemsize,
                                        sum_outputs, budget["vmem_limit"]):
            tr = max(8, (tr // 2) // 8 * 8)
        if not _fits_vmem(tr, L, cs, chunks, itemsize, sum_outputs,
                          budget["vmem_limit"]):
            use_pallas = False          # extremely wide rows: fall back

    if not use_pallas:
        # TODO(synk): jnp fallback covers non-last dim, ragged torch.chunk,
        # unaligned chunk sizes, tiny inputs and odd dtypes; XLA fuses these.
        pieces = _chunk_ref(x, chunks, dim)
        return sum(pieces) if sum_outputs else pieces

    cs = L // chunks
    x2 = x.reshape(R, L)                # free: merging contiguous lead dims
    grid = (pl.cdiv(R, tr),)            # partial last row-block is masked
    in_spec = pl.BlockSpec((tr, L), lambda i: (i, 0))
    cparams = pltpu.CompilerParams(
        dimension_semantics=("parallel",),   # shard row tiles over v7x's 2 TCs
        vmem_limit_bytes=budget["vmem_limit"],
    )

    if sum_outputs:
        # NOTE: bf16/f16 accumulate in f32 here (more accurate than the
        # dtype-native accumulation of the jnp fallback / torch); int32
        # accumulates in int32 to keep integer semantics exact.
        acc_dtype = jnp.float32 if jnp.issubdtype(x.dtype, jnp.floating) else jnp.int32
        out = pl.pallas_call(
            _make_sum_kernel(chunks, acc_dtype),
            out_shape=jax.ShapeDtypeStruct((R, cs), x.dtype),
            grid=grid,
            in_specs=[in_spec],
            out_specs=pl.BlockSpec((tr, cs), lambda i: (i, 0)),
            compiler_params=cparams,
        )(x2)
        return out.reshape(lead + (cs,))

    outs = pl.pallas_call(
        _make_split_kernel(chunks),
        out_shape=tuple(
            jax.ShapeDtypeStruct((R, cs), x.dtype) for _ in range(chunks)
        ),
        grid=grid,
        in_specs=[in_spec],
        out_specs=tuple(
            pl.BlockSpec((tr, cs), lambda i: (i, 0)) for _ in range(chunks)
        ),
        compiler_params=cparams,
    )(x2)
    return tuple(o.reshape(lead + (cs,)) for o in outs)


class Chunk:
    """JAX/Pallas equivalent of mimikit Chunk module (no parameters)."""

    def __init__(self, chunks: int, dim: int = -1, sum_outputs: bool = False,
                 force_pallas_split: bool = False):
        self.chunks = chunks
        self.dim = dim
        self.sum_outputs = sum_outputs
        self.force_pallas_split = force_pallas_split

    def __call__(self, x):
        return chunk_forward(x, self.chunks, dim=self.dim,
                             sum_outputs=self.sum_outputs,
                             force_pallas_split=self.force_pallas_split)


# ----------------------------- demo / test -----------------------------------

if __name__ == "__main__":
    key = jax.random.PRNGKey(0)

    # Main Pallas-path input: 2 MiB f32, cs=1024 lane-dense, R=128 rows
    # -> picker gives tr=32, grid=(4,) (multi-step, even, pipelined).
    B, C, L = 4, 32, 4096
    chunks = 4
    x = jax.random.normal(key, (B, C, L), dtype=jnp.float32)

    # --- sum_outputs=True (in-kernel tree reduction, single streaming pass) ---
    y_sum = jax.block_until_ready(Chunk(chunks, dim=-1, sum_outputs=True)(x))
    ref_sum = sum(jnp.split(x, chunks, axis=-1))
    assert y_sum.shape == (B, C, L // chunks)
    assert jnp.allclose(y_sum, ref_sum, atol=1e-5), "sum path mismatch"

    # --- sum_outputs=False via opt-in Pallas split (multi-output, one pass) ---
    y_tup = chunk_forward(x, chunks, dim=-1, sum_outputs=False,
                          force_pallas_split=True)
    y_tup = tuple(jax.block_until_ready(t) for t in y_tup)
    ref_tup = jnp.split(x, chunks, axis=-1)
    assert len(y_tup) == chunks
    for a, b in zip(y_tup, ref_tup):
        assert a.shape == (B, C, L // chunks)
        assert jnp.array_equal(a, b), "chunk path mismatch"

    # --- ragged row count (R=132): masked partial last row-block, even grid ---
    x_odd = jax.random.normal(jax.random.PRNGKey(1), (3, 44, 2048),
                              dtype=jnp.float32)
    y_odd = jax.block_until_ready(Chunk(4, dim=-1, sum_outputs=True)(x_odd))
    assert jnp.allclose(y_odd, sum(jnp.split(x_odd, 4, axis=-1)),
                        atol=1e-5), "ragged-R sum mismatch"

    # --- tiny / unaligned / non-last-dim inputs take the jnp fallback ---
    x_small = jax.random.normal(key, (2, 4, 16), dtype=jnp.float32)
    y_small = jax.block_until_ready(Chunk(4, dim=-1, sum_outputs=True)(x_small))
    assert jnp.allclose(y_small, sum(jnp.split(x_small, 4, axis=-1))), \
        "fallback sum mismatch"
    y_small_t = Chunk(2, dim=1, sum_outputs=False)(x_small)   # non-last dim
    assert len(y_small_t) == 2 and y_small_t[0].shape == (2, 2, 16)
    # ragged torch.chunk semantics (7 elems into 3 -> sizes 3,3,1)
    x_rag = jax.random.normal(key, (2, 7), dtype=jnp.float32)
    pieces = Chunk(3, dim=-1)(x_rag)
    assert tuple(p.shape[-1] for p in pieces) == (3, 3, 1)

    print("KERNEL_OK")
</pallas_src>

<mosaic_0001>
module attributes {stable_mosaic.version = 11 : i64} {
  func.func @kernel(%arg0: i32, %arg1: memref<32x4096xf32, #tpu.memory_space<vmem>>, %arg2: memref<32x1024xf32, #tpu.memory_space<vmem>>) attributes {dimension_semantics = [#tpu.dimension_semantics<parallel>], iteration_bounds = array<i64: 4>, scalar_prefetch = 0 : i64, scratch_operands = 0 : i64, tpu.core_type = #tpu.core_type<tc>, window_params = [{transform_indices = @transform_0, window_bounds = array<i64: 32, 4096>}, {transform_indices = @transform_1, window_bounds = array<i64: 32, 1024>}]} {
    %c0 = arith.constant 0 : index
    %c0_0 = arith.constant 0 : index
    %0 = vector.load %arg1[%c0, %c0_0] : memref<32x4096xf32, #tpu.memory_space<vmem>>, vector<32x1024xf32>
    %c0_1 = arith.constant 0 : index
    %c1024 = arith.constant 1024 : index
    %1 = vector.load %arg1[%c0_1, %c1024] : memref<32x4096xf32, #tpu.memory_space<vmem>>, vector<32x1024xf32>
    %c0_2 = arith.constant 0 : index
    %c2048 = arith.constant 2048 : index
    %2 = vector.load %arg1[%c0_2, %c2048] : memref<32x4096xf32, #tpu.memory_space<vmem>>, vector<32x1024xf32>
    %c0_3 = arith.constant 0 : index
    %c3072 = arith.constant 3072 : index
    %3 = vector.load %arg1[%c0_3, %c3072] : memref<32x4096xf32, #tpu.memory_space<vmem>>, vector<32x1024xf32>
    %4 = arith.addf %0, %1 : vector<32x1024xf32>
    %5 = arith.addf %2, %3 : vector<32x1024xf32>
    %6 = arith.addf %4, %5 : vector<32x1024xf32>
    %c0_4 = arith.constant 0 : index
    %c0_5 = arith.constant 0 : index
    %7 = vector.load %arg2[%c0_4, %c0_5] : memref<32x1024xf32, #tpu.memory_space<vmem>>, vector<32x1024xf32>
    tpu.vector_store %arg2[%c0_4, %c0_5], %6 {strides = array<i32>} : memref<32x1024xf32, #tpu.memory_space<vmem>>, vector<32x1024xf32>,
    return
  }
  func.func @transform_0(%arg0: i32) -> (i32, i32) {
    %c0_i32 = arith.constant 0 : i32
    %c0_i32_0 = arith.constant 0 : i32
    return %arg0, %c0_i32 : i32, i32
  }
  func.func @transform_1(%arg0: i32) -> (i32, i32) {
    %c0_i32 = arith.constant 0 : i32
    %c0_i32_0 = arith.constant 0 : i32
    return %arg0, %c0_i32 : i32, i32
  }
}

</mosaic_0001>

<llo_original>
// kernel: tpu_custom_call.1
$region0: #{tpu_custom_call.1}
  #allocation0 [shape = 'u32[]', space=smem, size = 0x4, offset = 0x4, fixed_abs, tag = 'smem constant byte address 0x4 - core index']
  #allocation1 [shape = 'u32[72,128]{1,0:T(1,128)}', space=vmem, size = 0x9000, scoped, tag = 'internal scratch']
  %s0 = inlined_call_operand.hbm [shape: f32[128,4096], index: 0, kind: input, shape index: {}]
  %s1 = inlined_call_operand.hbm [shape: f32[128,1024], index: 1, kind: output, shape index: {}]
  %s2 = sld [smem:[#allocation0]]
  $region41: #{tpu_custom_call.1} parent=0
    _
  %s4 = ssub.s32 1, %s2
  %s5 = scalar_select 0, %s4, %s2
  $region1: #{tpu_custom_call.1} parent=0
    #allocation2 [shape = 'u8[1048576]{0}', space=vmem, size = 0x100000, scoped, tag = 'input window, operand 0']
    #allocation3 [shape = 's32[2]{0}', space=sflag, size = 0x8, scoped, tag = 'scoped memory for tpu_custom_call.1']
    #allocation4 [shape = 's32[2]{0}', space=sflag, size = 0x8, scoped, tag = 'scoped memory for tpu_custom_call.1']
    #allocation5 [shape = 'u8[262144]{0}', space=vmem, size = 0x40000, scoped, tag = 'output window, operand 0']
    %6 = vsyncpa [#allocation3], 0
    %s7 = scalar_lea.sflag [#allocation3], 1
    %8 = vsyncpa %s7, 0
    %9 = vsyncpa [#allocation4], 0
    %s10 = scalar_lea.sflag [#allocation4], 1
    %11 = vsyncpa %s10, 0
    loop: start=0, step=1, limit=6
    $region2: #{tpu_custom_call.1} parent=1 // loop_pre_header
      _
    $region3: #{tpu_custom_call.1} parent=1 // loop_header
      %s13 = sphi 0, %s17
      %p14 = scmp.ge.s32.totalorder %s13, 6
      %s23 = sphi 0, %s25
      %s26 = sphi 0, %s23
      %s27 = sphi 0, %s26
      %s43 = sphi 0, %s27
      %s49 = sphi 0, %s51
      %s52 = sphi 0, %s49
      %s53 = sphi 0, %s52
      %s69 = sphi 0, %s53
    $region4: #{tpu_custom_call.1} parent=1 // loop_header_branch
      %16 = sbr.rel (%p14) target = $region8
    $region5: #{tpu_custom_call.1} parent=1 // loop_body
      %s18 = ssub.s32 %s13, 1
      %s19 = ssub.s32 %s13, 2
      %s20 = sadd.s32 %s13, 1
      %s21 = ssub.s32 %s13, %s20
      %p22 = scmp.eq.s32.totalorder %s21, 0
      %s24 = sadd.s32 %s23, 1
      %s25 = scalar_select %p22, %s23, %s24
      %p28 = pneg %p22
      %p29 = scmp.eq.s32.totalorder %s13, 3
      %p30 = por %p28, %p29
      %p31 = scmp.ne.s32.totalorder %s23, %s26
      %p32 = scmp.eq.s32.totalorder %s13, 0
      %p33 = por %p31, %p32
      %p34 = scmp.ne.s32.totalorder %s23, %s26
      %p35 = scmp.eq.s32.totalorder %s18, 3
      %p36 = por %p34, %p35
      %p37 = scmp.ne.s32.totalorder %s26, %s27
      %p38 = scmp.eq.s32.totalorder %s18, 0
      %p39 = por %p37, %p38
      %p40 = scmp.ne.s32.totalorder %s26, %s27
      %p41 = scmp.eq.s32.totalorder %s19, 3
      %p42 = por %p40, %p41
      %p44 = scmp.ne.s32.totalorder %s27, %s43
      %p45 = scmp.eq.s32.totalorder %s19, 0
      %p46 = por %p44, %p45
      %s47 = ssub.s32 %s13, %s20
      %p48 = scmp.eq.s32.totalorder %s47, 0
      %s50 = sadd.s32 %s49, 1
      %s51 = scalar_select %p48, %s49, %s50
      %p54 = pneg %p48
      %p55 = scmp.eq.s32.totalorder %s13, 3
      %p56 = por %p54, %p55
      %p57 = scmp.ne.s32.totalorder %s49, %s52
      %p58 = scmp.eq.s32.totalorder %s13, 0
      %p59 = por %p57, %p58
      %p60 = scmp.ne.s32.totalorder %s49, %s52
      %p61 = scmp.eq.s32.totalorder %s18, 3
      %p62 = por %p60, %p61
      %p63 = scmp.ne.s32.totalorder %s52, %s53
      %p64 = scmp.eq.s32.totalorder %s18, 0
      %p65 = por %p63, %p64
      %p66 = scmp.ne.s32.totalorder %s52, %s53
      %p67 = scmp.eq.s32.totalorder %s19, 3
      %p68 = por %p66, %p67
      %p70 = scmp.ne.s32.totalorder %s53, %s69
      %p71 = scmp.eq.s32.totalorder %s19, 0
      %p72 = por %p70, %p71
      %p73 = scmp.le.s32.totalorder 1, %s13
      %p74 = scmp.lt.s32.totalorder %s13, 5
      %p75 = pnand %p73, %p74
      %p76 = pneg %p75
      // Predicated region
      $region9: #{tpu_custom_call.1} parent=5 // pred_check
        _
      $region10: #{tpu_custom_call.1} parent=5 // pred_check_branch
        %78 = sbr.rel (%p75) target = $region12
      $region11: #{tpu_custom_call.1} parent=5 // pred_region
        %s79 = ssub.s32 %s13, 1
      $region12: #{tpu_custom_call.1} parent=5 // pred_fallthru
        _
      %p80 = scmp.lt.s32.totalorder %s13, 4
      // Predicated region
      $region13: #{tpu_custom_call.1} parent=5 // pred_check
        %p81 = pneg %p80
      $region14: #{tpu_custom_call.1} parent=5 // pred_check_branch
        %83 = sbr.rel (%p81) target = $region16
      $region15: #{tpu_custom_call.1} parent=5 // pred_region
        // Predicated region
        $region17: #{tpu_custom_call.1} parent=15 // pred_check
          %p84 = pneg %p33
        $region18: #{tpu_custom_call.1} parent=15 // pred_check_branch
          %86 = sbr.rel (%p84) target = $region20
        $region19: #{tpu_custom_call.1} parent=15 // pred_region
          %s87 = sand.u32 %s23, 1
          %s88 = scalar_lea.sflag [#allocation3], %s87
          %s89 = sand.u32 %s23, 1
          %s90 = smul.addr %s89, 1024
          %s91 = scalar_lea.vmem [#allocation2], %s90
          %s92 = smul.u32 4, %s13
          %94 = vsyncadd %s88, 0
          %s95 = smul.addr %s92, 32
          %s96 = smul.addr %s95, 8
          %s97 = scalar_lea.hbm %s0, %s96
          %s98 = sshll.u32 %s97, 4
          %s99 = int_to_ptr.hbm [resolvable:$true] %s98
          %s100 = sshll.u32 %s91, 4
          %s101 = int_to_ptr.vmem [resolvable:$true] %s100
          %106 = dma.hbm_to_vmem [thread:$0]  %s99, 16384, %s101, %s88, 4096, 4096, 256
        $region20: #{tpu_custom_call.1} parent=15 // pred_fallthru
          _
      $region16: #{tpu_custom_call.1} parent=5 // pred_fallthru
        _
      %p107 = scmp.le.s32.totalorder 1, %s13
      %p108 = scmp.lt.s32.totalorder %s13, 5
      %p109 = pnand %p107, %p108
      %p110 = pneg %p109
      // Predicated region
      $region21: #{tpu_custom_call.1} parent=5 // pred_check
        _
      $region22: #{tpu_custom_call.1} parent=5 // pred_check_branch
        %112 = sbr.rel (%p109) target = $region24
      $region23: #{tpu_custom_call.1} parent=5 // pred_region
        %s113 = ssub.s32 %s13, 1
        %s114 = sand.u32 %s26, 1
        %s115 = scalar_lea.sflag [#allocation3], %s114
        %s116 = sand.u32 %s26, 1
        %s117 = smul.addr %s116, 1024
        %s118 = scalar_lea.vmem [#allocation2], %s117
        // Predicated region
        $region25: #{tpu_custom_call.1} parent=23 // pred_check
          %p119 = pneg %p39
        $region26: #{tpu_custom_call.1} parent=23 // pred_check_branch
          %121 = sbr.rel (%p119) target = $region28
        $region27: #{tpu_custom_call.1} parent=23 // pred_region
          %123 = dma.done %s115, 16384
        $region28: #{tpu_custom_call.1} parent=23 // pred_fallthru
          _
        %s124 = sand.u32 %s26, 1
        %s125 = scalar_lea.sflag [#allocation3], %s124
        %s126 = sand.u32 %s26, 1
        %s127 = smul.addr %s126, 1024
        %s128 = scalar_lea.vmem [#allocation2], %s127
        %p129 = pneg %p39
        %p130 = pneg %p36
        %p131 = pneg %p65
        %p132 = pneg %p62
        %s133 = sand.u32 %s52, 1
        %s134 = scalar_lea.sflag [#allocation4], %s133
        %s135 = sand.u32 %s52, 1
        %s136 = smul.addr %s135, 256
        %s137 = scalar_lea.vmem [#allocation5], %s136
        %s138 = smul.u32 4, %s18
        %s139 = smul.u32 4, %s18
        %v140 = vld [vmem:[%s118] sm:$0xff]
        %v141 = vld [vmem:[%s118 + $0x8] sm:$0xff]
        %v142 = vld [vmem:[%s118 + $0x10] sm:$0xff]
        %v143 = vld [vmem:[%s118 + $0x18] sm:$0xff]
        %v144 = vld [vmem:[%s118 + $0x20] sm:$0xff]
        %v145 = vld [vmem:[%s118 + $0x28] sm:$0xff]
        %v146 = vld [vmem:[%s118 + $0x30] sm:$0xff]
        %v147 = vld [vmem:[%s118 + $0x38] sm:$0xff]
        %v148 = vld [vmem:[%s118 + $0x100] sm:$0xff]
        %v149 = vld [vmem:[%s118 + $0x108] sm:$0xff]
        %v150 = vld [vmem:[%s118 + $0x110] sm:$0xff]
        %v151 = vld [vmem:[%s118 + $0x118] sm:$0xff]
        %v152 = vld [vmem:[%s118 + $0x120] sm:$0xff]
        %v153 = vld [vmem:[%s118 + $0x128] sm:$0xff]
        %v154 = vld [vmem:[%s118 + $0x130] sm:$0xff]
        %v155 = vld [vmem:[%s118 + $0x138] sm:$0xff]
        %v156 = vld [vmem:[%s118 + $0x200] sm:$0xff]
        %v157 = vld [vmem:[%s118 + $0x208] sm:$0xff]
        %v158 = vld [vmem:[%s118 + $0x210] sm:$0xff]
        %v159 = vld [vmem:[%s118 + $0x218] sm:$0xff]
        %v160 = vld [vmem:[%s118 + $0x220] sm:$0xff]
        %v161 = vld [vmem:[%s118 + $0x228] sm:$0xff]
        %v162 = vld [vmem:[%s118 + $0x230] sm:$0xff]
        %v163 = vld [vmem:[%s118 + $0x238] sm:$0xff]
        %v164 = vld [vmem:[%s118 + $0x300] sm:$0xff]
        %v165 = vld [vmem:[%s118 + $0x308] sm:$0xff]
        %v166 = vld [vmem:[%s118 + $0x310] sm:$0xff]
        %v167 = vld [vmem:[%s118 + $0x318] sm:$0xff]
        %v168 = vld [vmem:[%s118 + $0x320] sm:$0xff]
        %v169 = vld [vmem:[%s118 + $0x328] sm:$0xff]
        %v170 = vld [vmem:[%s118 + $0x330] sm:$0xff]
        %v171 = vld [vmem:[%s118 + $0x338] sm:$0xff]
        %v172 = vld [vmem:[%s118 + $0x40] sm:$0xff]
        %v173 = vld [vmem:[%s118 + $0x48] sm:$0xff]
        %v174 = vld [vmem:[%s118 + $0x50] sm:$0xff]
        %v175 = vld [vmem:[%s118 + $0x58] sm:$0xff]
        %v176 = vld [vmem:[%s118 + $0x60] sm:$0xff]
        %v177 = vld [vmem:[%s118 + $0x68] sm:$0xff]
        %v178 = vld [vmem:[%s118 + $0x70] sm:$0xff]
        %v179 = vld [vmem:[%s118 + $0x78] sm:$0xff]
        %v180 = vld [vmem:[%s118 + $0x140] sm:$0xff]
        %v181 = vld [vmem:[%s118 + $0x148] sm:$0xff]
        %v182 = vld [vmem:[%s118 + $0x150] sm:$0xff]
        %v183 = vld [vmem:[%s118 + $0x158] sm:$0xff]
        %v184 = vld [vmem:[%s118 + $0x160] sm:$0xff]
        %v185 = vld [vmem:[%s118 + $0x168] sm:$0xff]
        %v186 = vld [vmem:[%s118 + $0x170] sm:$0xff]
        %v187 = vld [vmem:[%s118 + $0x178] sm:$0xff]
        %v188 = vld [vmem:[%s118 + $0x240] sm:$0xff]
        %v189 = vld [vmem:[%s118 + $0x248] sm:$0xff]
        %v190 = vld [vmem:[%s118 + $0x250] sm:$0xff]
        %v191 = vld [vmem:[%s118 + $0x258] sm:$0xff]
        %v192 = vld [vmem:[%s118 + $0x260] sm:$0xff]
        %v193 = vld [vmem:[%s118 + $0x268] sm:$0xff]
        %v194 = vld [vmem:[%s118 + $0x270] sm:$0xff]
        %v195 = vld [vmem:[%s118 + $0x278] sm:$0xff]
        %v196 = vld [vmem:[%s118 + $0x340] sm:$0xff]
        %v197 = vld [vmem:[%s118 + $0x348] sm:$0xff]
        %v198 = vld [vmem:[%s118 + $0x350] sm:$0xff]
        %v199 = vld [vmem:[%s118 + $0x358] sm:$0xff]
        %v200 = vld [vmem:[%s118 + $0x360] sm:$0xff]
        %v201 = vld [vmem:[%s118 + $0x368] sm:$0xff]
        %v202 = vld [vmem:[%s118 + $0x370] sm:$0xff]
        %v203 = vld [vmem:[%s118 + $0x378] sm:$0xff]
        %v204 = vld [vmem:[%s118 + $0x80] sm:$0xff]
        %v205 = vld [vmem:[%s118 + $0x88] sm:$0xff]
        %v206 = vld [vmem:[%s118 + $0x90] sm:$0xff]
        %v207 = vld [vmem:[%s118 + $0x98] sm:$0xff]
        %v208 = vld [vmem:[%s118 + $0xa0] sm:$0xff]
        %v209 = vld [vmem:[%s118 + $0xa8] sm:$0xff]
        %v210 = vld [vmem:[%s118 + $0xb0] sm:$0xff]
        %v211 = vld [vmem:[%s118 + $0xb8] sm:$0xff]
        %v212 = vld [vmem:[%s118 + $0x180] sm:$0xff]
        %v213 = vld [vmem:[%s118 + $0x188] sm:$0xff]
        %v214 = vld [vmem:[%s118 + $0x190] sm:$0xff]
        %v215 = vld [vmem:[%s118 + $0x198] sm:$0xff]
        %v216 = vld [vmem:[%s118 + $0x1a0] sm:$0xff]
        %v217 = vld [vmem:[%s118 + $0x1a8] sm:$0xff]
        %v218 = vld [vmem:[%s118 + $0x1b0] sm:$0xff]
        %v219 = vld [vmem:[%s118 + $0x1b8] sm:$0xff]
        %v220 = vld [vmem:[%s118 + $0x280] sm:$0xff]
        %v221 = vld [vmem:[%s118 + $0x288] sm:$0xff]
        %v222 = vld [vmem:[%s118 + $0x290] sm:$0xff]
        %v223 = vld [vmem:[%s118 + $0x298] sm:$0xff]
        %v224 = vld [vmem:[%s118 + $0x2a0] sm:$0xff]
        %v225 = vld [vmem:[%s118 + $0x2a8] sm:$0xff]
        %v226 = vld [vmem:[%s118 + $0x2b0] sm:$0xff]
        %v227 = vld [vmem:[%s118 + $0x2b8] sm:$0xff]
        %v228 = vld [vmem:[%s118 + $0x380] sm:$0xff]
        %v229 = vld [vmem:[%s118 + $0x388] sm:$0xff]
        %v230 = vld [vmem:[%s118 + $0x390] sm:$0xff]
        %v231 = vld [vmem:[%s118 + $0x398] sm:$0xff]
        %v232 = vld [vmem:[%s118 + $0x3a0] sm:$0xff]
        %v233 = vld [vmem:[%s118 + $0x3a8] sm:$0xff]
        %v234 = vld [vmem:[%s118 + $0x3b0] sm:$0xff]
        %v235 = vld [vmem:[%s118 + $0x3b8] sm:$0xff]
        %v236 = vld [vmem:[%s118 + $0xc0] sm:$0xff]
        %v237 = vld [vmem:[%s118 + $0xc8] sm:$0xff]
        %v238 = vld [vmem:[%s118 + $0xd0] sm:$0xff]
        %v239 = vld [vmem:[%s118 + $0xd8] sm:$0xff]
        %v240 = vld [vmem:[%s118 + $0xe0] sm:$0xff]
        %v241 = vld [vmem:[%s118 + $0xe8] sm:$0xff]
        %v242 = vld [vmem:[%s118 + $0xf0] sm:$0xff]
        %v243 = vld [vmem:[%s118 + $0xf8] sm:$0xff]
        %v244 = vld [vmem:[%s118 + $0x1c0] sm:$0xff]
        %v245 = vld [vmem:[%s118 + $0x1c8] sm:$0xff]
        %v246 = vld [vmem:[%s118 + $0x1d0] sm:$0xff]
        %v247 = vld [vmem:[%s118 + $0x1d8] sm:$0xff]
        %v248 = vld [vmem:[%s118 + $0x1e0] sm:$0xff]
        %v249 = vld [vmem:[%s118 + $0x1e8] sm:$0xff]
        %v250 = vld [vmem:[%s118 + $0x1f0] sm:$0xff]
        %v251 = vld [vmem:[%s118 + $0x1f8] sm:$0xff]
        %v252 = vld [vmem:[%s118 + $0x2c0] sm:$0xff]
        %v253 = vld [vmem:[%s118 + $0x2c8] sm:$0xff]
        %v254 = vld [vmem:[%s118 + $0x2d0] sm:$0xff]
        %v255 = vld [vmem:[%s118 + $0x2d8] sm:$0xff]
        %v256 = vld [vmem:[%s118 + $0x2e0] sm:$0xff]
        %v257 = vld [vmem:[%s118 + $0x2e8] sm:$0xff]
        %v258 = vld [vmem:[%s118 + $0x2f0] sm:$0xff]
        %v259 = vld [vmem:[%s118 + $0x2f8] sm:$0xff]
        %v260 = vld [vmem:[%s118 + $0x3c0] sm:$0xff]
        %v261 = vld [vmem:[%s118 + $0x3c8] sm:$0xff]
        %v262 = vld [vmem:[%s118 + $0x3d0] sm:$0xff]
        %v263 = vld [vmem:[%s118 + $0x3d8] sm:$0xff]
        %v264 = vld [vmem:[%s118 + $0x3e0] sm:$0xff]
        %v265 = vld [vmem:[%s118 + $0x3e8] sm:$0xff]
        %v266 = vld [vmem:[%s118 + $0x3f0] sm:$0xff]
        %v267 = vld [vmem:[%s118 + $0x3f8] sm:$0xff]
        %v268 = vadd.f32 %v140, %v172
        %v269 = vadd.f32 %v141, %v173
        %v270 = vadd.f32 %v142, %v174
        %v271 = vadd.f32 %v143, %v175
        %v272 = vadd.f32 %v144, %v176
        %v273 = vadd.f32 %v145, %v177
        %v274 = vadd.f32 %v146, %v178
        %v275 = vadd.f32 %v147, %v179
        %v276 = vadd.f32 %v148, %v180
        %v277 = vadd.f32 %v149, %v181
        %v278 = vadd.f32 %v150, %v182
        %v279 = vadd.f32 %v151, %v183
        %v280 = vadd.f32 %v152, %v184
        %v281 = vadd.f32 %v153, %v185
        %v282 = vadd.f32 %v154, %v186
        %v283 = vadd.f32 %v155, %v187
        %v284 = vadd.f32 %v156, %v188
        %v285 = vadd.f32 %v157, %v189
        %v286 = vadd.f32 %v158, %v190
        %v287 = vadd.f32 %v159, %v191
        %v288 = vadd.f32 %v160, %v192
        %v289 = vadd.f32 %v161, %v193
        %v290 = vadd.f32 %v162, %v194
        %v291 = vadd.f32 %v163, %v195
        %v292 = vadd.f32 %v164, %v196
        %v293 = vadd.f32 %v165, %v197
        %v294 = vadd.f32 %v166, %v198
        %v295 = vadd.f32 %v167, %v199
        %v296 = vadd.f32 %v168, %v200
        %v297 = vadd.f32 %v169, %v201
        %v298 = vadd.f32 %v170, %v202
        %v299 = vadd.f32 %v171, %v203
        %v300 = vadd.f32 %v204, %v236
        %v301 = vadd.f32 %v205, %v237
        %v302 = vadd.f32 %v206, %v238
        %v303 = vadd.f32 %v207, %v239
        %v304 = vadd.f32 %v208, %v240
        %v305 = vadd.f32 %v209, %v241
        %v306 = vadd.f32 %v210, %v242
        %v307 = vadd.f32 %v211, %v243
        %v308 = vadd.f32 %v212, %v244
        %v309 = vadd.f32 %v213, %v245
        %v310 = vadd.f32 %v214, %v246
        %v311 = vadd.f32 %v215, %v247
        %v312 = vadd.f32 %v216, %v248
        %v313 = vadd.f32 %v217, %v249
        %v314 = vadd.f32 %v218, %v250
        %v315 = vadd.f32 %v219, %v251
        %v316 = vadd.f32 %v220, %v252
        %v317 = vadd.f32 %v221, %v253
        %v318 = vadd.f32 %v222, %v254
        %v319 = vadd.f32 %v223, %v255
        %v320 = vadd.f32 %v224, %v256
        %v321 = vadd.f32 %v225, %v257
        %v322 = vadd.f32 %v226, %v258
        %v323 = vadd.f32 %v227, %v259
        %v324 = vadd.f32 %v228, %v260
        %v325 = vadd.f32 %v229, %v261
        %v326 = vadd.f32 %v230, %v262
        %v327 = vadd.f32 %v231, %v263
        %v328 = vadd.f32 %v232, %v264
        %v329 = vadd.f32 %v233, %v265
        %v330 = vadd.f32 %v234, %v266
        %v331 = vadd.f32 %v235, %v267
        %v332 = vadd.f32 %v268, %v300
        %v333 = vadd.f32 %v269, %v301
        %v334 = vadd.f32 %v270, %v302
        %v335 = vadd.f32 %v271, %v303
        %v336 = vadd.f32 %v272, %v304
        %v337 = vadd.f32 %v273, %v305
        %v338 = vadd.f32 %v274, %v306
        %v339 = vadd.f32 %v275, %v307
        %v340 = vadd.f32 %v276, %v308
        %v341 = vadd.f32 %v277, %v309
        %v342 = vadd.f32 %v278, %v310
        %v343 = vadd.f32 %v279, %v311
        %v344 = vadd.f32 %v280, %v312
        %v345 = vadd.f32 %v281, %v313
        %v346 = vadd.f32 %v282, %v314
        %v347 = vadd.f32 %v283, %v315
        %v348 = vadd.f32 %v284, %v316
        %v349 = vadd.f32 %v285, %v317
        %v350 = vadd.f32 %v286, %v318
        %v351 = vadd.f32 %v287, %v319
        %v352 = vadd.f32 %v288, %v320
        %v353 = vadd.f32 %v289, %v321
        %v354 = vadd.f32 %v290, %v322
        %v355 = vadd.f32 %v291, %v323
        %v356 = vadd.f32 %v292, %v324
        %v357 = vadd.f32 %v293, %v325
        %v358 = vadd.f32 %v294, %v326
        %v359 = vadd.f32 %v295, %v327
        %v360 = vadd.f32 %v296, %v328
        %v361 = vadd.f32 %v297, %v329
        %v362 = vadd.f32 %v298, %v330
        %v363 = vadd.f32 %v299, %v331
        %364 = vst [vmem:[%s137] sm:$0xff] %v332
        %365 = vst [vmem:[%s137 + $0x8] sm:$0xff] %v333
        %366 = vst [vmem:[%s137 + $0x10] sm:$0xff] %v334
        %367 = vst [vmem:[%s137 + $0x18] sm:$0xff] %v335
        %368 = vst [vmem:[%s137 + $0x20] sm:$0xff] %v336
        %369 = vst [vmem:[%s137 + $0x28] sm:$0xff] %v337
        %370 = vst [vmem:[%s137 + $0x30] sm:$0xff] %v338
        %371 = vst [vmem:[%s137 + $0x38] sm:$0xff] %v339
        %372 = vst [vmem:[%s137 + $0x40] sm:$0xff] %v340
        %373 = vst [vmem:[%s137 + $0x48] sm:$0xff] %v341
        %374 = vst [vmem:[%s137 + $0x50] sm:$0xff] %v342
        %375 = vst [vmem:[%s137 + $0x58] sm:$0xff] %v343
        %376 = vst [vmem:[%s137 + $0x60] sm:$0xff] %v344
        %377 = vst [vmem:[%s137 + $0x68] sm:$0xff] %v345
        %378 = vst [vmem:[%s137 + $0x70] sm:$0xff] %v346
        %379 = vst [vmem:[%s137 + $0x78] sm:$0xff] %v347
        %380 = vst [vmem:[%s137 + $0x80] sm:$0xff] %v348
        %381 = vst [vmem:[%s137 + $0x88] sm:$0xff] %v349
        %382 = vst [vmem:[%s137 + $0x90] sm:$0xff] %v350
        %383 = vst [vmem:[%s137 + $0x98] sm:$0xff] %v351
        %384 = vst [vmem:[%s137 + $0xa0] sm:$0xff] %v352
        %385 = vst [vmem:[%s137 + $0xa8] sm:$0xff] %v353
        %386 = vst [vmem:[%s137 + $0xb0] sm:$0xff] %v354
        %387 = vst [vmem:[%s137 + $0xb8] sm:$0xff] %v355
        %388 = vst [vmem:[%s137 + $0xc0] sm:$0xff] %v356
        %389 = vst [vmem:[%s137 + $0xc8] sm:$0xff] %v357
        %390 = vst [vmem:[%s137 + $0xd0] sm:$0xff] %v358
        %391 = vst [vmem:[%s137 + $0xd8] sm:$0xff] %v359
        %392 = vst [vmem:[%s137 + $0xe0] sm:$0xff] %v360
        %393 = vst [vmem:[%s137 + $0xe8] sm:$0xff] %v361
        %394 = vst [vmem:[%s137 + $0xf0] sm:$0xff] %v362
        %395 = vst [vmem:[%s137 + $0xf8] sm:$0xff] %v363
        %s396 = sand.u32 %s52, 1
        %s397 = scalar_lea.sflag [#allocation4], %s396
        %s398 = sand.u32 %s52, 1
        %s399 = smul.addr %s398, 256
        %s400 = scalar_lea.vmem [#allocation5], %s399
        // Predicated region
        $region29: #{tpu_custom_call.1} parent=23 // pred_check
          %p401 = pneg %p62
        $region30: #{tpu_custom_call.1} parent=23 // pred_check_branch
          %403 = sbr.rel (%p401) target = $region32
        $region31: #{tpu_custom_call.1} parent=23 // pred_region
          %s404 = smul.u32 4, %s18
          %406 = vsyncadd %s397, 0
          %s407 = smul.addr %s404, 8
          %s408 = smul.addr %s407, 8
          %s409 = scalar_lea.hbm %s1, %s408
          %s410 = sshll.u32 %s400, 4
          %s411 = int_to_ptr.vmem [resolvable:$true] %s410
          %s412 = sshll.u32 %s409, 4
          %s413 = int_to_ptr.hbm [resolvable:$true] %s412
          %418 = dma.vmem_to_hbm [thread:$0]  %s411, 4096, %s413, %s397, 1024, 1024, 64
        $region32: #{tpu_custom_call.1} parent=23 // pred_fallthru
          _
      $region24: #{tpu_custom_call.1} parent=5 // pred_fallthru
        _
      %p419 = scmp.le.s32.totalorder 2, %s13
      // Predicated region
      $region33: #{tpu_custom_call.1} parent=5 // pred_check
        %p420 = pneg %p419
      $region34: #{tpu_custom_call.1} parent=5 // pred_check_branch
        %422 = sbr.rel (%p420) target = $region36
      $region35: #{tpu_custom_call.1} parent=5 // pred_region
        %s423 = ssub.s32 %s13, 2
        // Predicated region
        $region37: #{tpu_custom_call.1} parent=35 // pred_check
          %p424 = pneg %p68
        $region38: #{tpu_custom_call.1} parent=35 // pred_check_branch
          %426 = sbr.rel (%p424) target = $region40
        $region39: #{tpu_custom_call.1} parent=35 // pred_region
          %s427 = sand.u32 %s53, 1
          %s428 = scalar_lea.sflag [#allocation4], %s427
          %s429 = sand.u32 %s53, 1
          %s430 = smul.addr %s429, 256
          %s431 = scalar_lea.vmem [#allocation5], %s430
          %433 = dma.done %s428, 4096
        $region40: #{tpu_custom_call.1} parent=35 // pred_fallthru
          _
      $region36: #{tpu_custom_call.1} parent=5 // pred_fallthru
        _
    $region6: #{tpu_custom_call.1} parent=1 // loop_footer
      %s17 = sadd.s32 1, %s13
    $region7: #{tpu_custom_call.1} parent=1 // loop_footer_branch
      %12 = sbr.rel target = $region3
    $region8: #{tpu_custom_call.1} parent=1 // loop_exit
      _
    %434 = vsyncpa [#allocation3], 1
    %s435 = scalar_lea.sflag [#allocation3], 1
    %436 = vsyncpa %s435, 1
    %437 = vsyncpa [#allocation4], 1
    %s438 = scalar_lea.sflag [#allocation4], 1
    %439 = vsyncpa %s438, 1

</llo_original>
